<compile_context>
chip_gen: v5e
topology: v5e:2x2
jax: 0.10.0
libtpu: 0.0.40
codegen_flags: <defaults>
</compile_context>

<pallas_src>
import jax
import jax.numpy as jnp
from jax.experimental import pallas as pl
from jax.experimental.pallas import tpu as pltpu

_LANE = 128
_VMEM_BUDGET = 4 * 1024 * 1024   # bytes per input tile (double-buffered => ~8 MiB)
_MAX_TILE_S = 4096               # cap on lane-dim tile for the rows layout


def _round_up(x, m):
    return ((x + m - 1) // m) * m


def _sublane_multiple(dtype):
    # f32 -> 8, bf16 -> 16, int8/fp8 -> 32
    return max(8, 32 // jnp.dtype(dtype).itemsize)


def _pick_spatial_tile(spatial):
    """Lane-dim tile for the (rows, spatial) layout. Prefer no padding."""
    if spatial <= _MAX_TILE_S:
        return spatial, spatial                      # full extent, no pad
    t = (_MAX_TILE_S // _LANE) * _LANE
    while t >= _LANE:                                # 128-aligned divisor?
        if spatial % t == 0:
            return t, spatial
        t -= _LANE
    tile = (_MAX_TILE_S // _LANE) * _LANE            # no clean divisor: pad
    return tile, _round_up(spatial, tile)


def _pick_row_tile(rows, sub, max_rows):
    """Sublane-dim tile: multiple of `sub`, divides the aligned row count."""
    rows_aligned = _round_up(rows, sub)
    cap = max(sub, min(max_rows, rows_aligned))
    t = (cap // sub) * sub
    while t >= sub:
        if rows_aligned % t == 0:
            return t, rows_aligned
        t -= sub
    return sub, rows_aligned


def _mean_pool_rows(x2d, true_spatial):
    """x2d: (rows, spatial) -> (rows,) mean over the last axis."""
    rows, spatial = x2d.shape
    dtype = x2d.dtype
    itemsize = jnp.dtype(dtype).itemsize
    sub = _sublane_multiple(dtype)

    tile_s, spatial_p = _pick_spatial_tile(spatial)
    lanes = _round_up(tile_s, _LANE)
    max_rows = max(sub, (_VMEM_BUDGET // (lanes * itemsize)) // sub * sub)
    tile_r, rows_p = _pick_row_tile(rows, sub, max_rows)

    if (rows_p, spatial_p) != (rows, spatial):
        # Zero-padding is safe: we divide by the TRUE spatial count below and
        # padded rows are sliced away after the call.
        x2d = jnp.pad(x2d, ((0, rows_p - rows), (0, spatial_p - spatial)))

    inv = 1.0 / float(true_spatial)
    grid = (rows_p // tile_r, spatial_p // tile_s)

    def kernel(x_ref, o_ref, acc_ref):
        j = pl.program_id(1)

        @pl.when(j == 0)
        def _init():
            acc_ref[...] = jnp.zeros_like(acc_ref)

        # Accumulate per-row partial sums in f32 (no tile-wide upcast).
        acc_ref[...] += jnp.sum(x_ref[...], axis=-1, keepdims=True,
                                dtype=jnp.float32)

        @pl.when(j == pl.num_programs(1) - 1)
        def _finalize():
            o_ref[...] = (acc_ref[...] * inv).astype(o_ref.dtype)

    out = pl.pallas_call(
        kernel,
        out_shape=jax.ShapeDtypeStruct((rows_p, 1), dtype),
        grid_spec=pltpu.PrefetchScalarGridSpec(
            num_scalar_prefetch=0,
            grid=grid,
            in_specs=[pl.BlockSpec((tile_r, tile_s), lambda i, j: (i, j))],
            out_specs=pl.BlockSpec((tile_r, 1), lambda i, j: (i, 0)),
            scratch_shapes=[pltpu.VMEM((tile_r, 1), jnp.float32)],
        ),
        compiler_params=pltpu.CompilerParams(
            dimension_semantics=("parallel", "arbitrary")),
        cost_estimate=pl.CostEstimate(
            flops=rows_p * spatial_p,
            transcendentals=0,
            bytes_accessed=rows_p * spatial_p * itemsize + rows_p * itemsize),
    )(x2d)
    return out[:rows, 0]


def _mean_pool_nhwc_native(x3, true_spatial):
    """x3: (B, spatial, C) with C >= 128 -> (B, C) mean over spatial.

    Native layout: no transpose HBM pass; C stays the lane dim.
    """
    b, spatial, c = x3.shape
    dtype = x3.dtype
    itemsize = jnp.dtype(dtype).itemsize
    sub = _sublane_multiple(dtype)
    lanes = _round_up(c, _LANE)

    max_ts = max(sub, (_VMEM_BUDGET // (lanes * itemsize)) // sub * sub)
    if spatial <= max_ts:
        tile_s, spatial_p = spatial, spatial          # full extent, no pad
    else:
        tile_s = None
        t = max_ts
        while t >= sub:                               # divisor => no pad
            if spatial % t == 0:
                tile_s = t
                break
            t -= sub
        if tile_s is None:
            tile_s = max_ts
        spatial_p = _round_up(spatial, tile_s)

    if spatial_p != spatial:
        x3 = jnp.pad(x3, ((0, 0), (0, spatial_p - spatial), (0, 0)))

    inv = 1.0 / float(true_spatial)
    grid = (b, spatial_p // tile_s)

    def kernel(x_ref, o_ref, acc_ref):
        j = pl.program_id(1)

        @pl.when(j == 0)
        def _init():
            acc_ref[...] = jnp.zeros_like(acc_ref)

        # Sublane-axis reduction; f32 accumulation without tile-wide upcast.
        acc_ref[...] += jnp.sum(x_ref[...], axis=1, keepdims=True,
                                dtype=jnp.float32)

        @pl.when(j == pl.num_programs(1) - 1)
        def _finalize():
            o_ref[...] = (acc_ref[...] * inv).astype(o_ref.dtype)

    out = pl.pallas_call(
        kernel,
        out_shape=jax.ShapeDtypeStruct((b, 1, c), dtype),
        grid_spec=pltpu.PrefetchScalarGridSpec(
            num_scalar_prefetch=0,
            grid=grid,
            in_specs=[pl.BlockSpec((1, tile_s, c), lambda i, j: (i, j, 0))],
            out_specs=pl.BlockSpec((1, 1, c), lambda i, j: (i, 0, 0)),
            scratch_shapes=[pltpu.VMEM((1, 1, c), jnp.float32)],
        ),
        compiler_params=pltpu.CompilerParams(
            dimension_semantics=("parallel", "arbitrary")),
        cost_estimate=pl.CostEstimate(
            flops=b * spatial_p * c,
            transcendentals=0,
            bytes_accessed=b * spatial_p * c * itemsize + b * c * itemsize),
    )(x3)
    return out.reshape(b, c)


def mean_pool(x, channel_loc=1):
    """Pallas equivalent of MeanPool(channel_loc)(x).

    channel_loc == 1: x is (B, C, H, W) -> (B, C)
    otherwise:        x is (B, H, W, C) -> (B, C)
    """
    if channel_loc == 1:
        b, c, h, w = x.shape
        out = _mean_pool_rows(x.reshape(b * c, h * w), h * w)
        return out.reshape(b, c)

    b, h, w, c = x.shape
    if c >= _LANE:
        # Native-layout reduction: avoids a full transpose pass through HBM.
        return _mean_pool_nhwc_native(x.reshape(b, h * w, c), h * w)
    # Small C: a C-wide lane block would waste >90% of each vreg; pay the
    # transpose once and reduce over the wide spatial (lane) axis instead.
    x2d = jnp.transpose(x, (0, 3, 1, 2)).reshape(b * c, h * w)
    out = _mean_pool_rows(x2d, h * w)
    return out.reshape(b, c)


if __name__ == "__main__":
    key = jax.random.PRNGKey(0)
    k1, k2, k3, k4 = jax.random.split(key, 4)

    # 1) channel_loc = 1 path (NCHW)
    x_nchw = jax.random.normal(k1, (2, 4, 16, 16), dtype=jnp.float32)
    out1 = jax.block_until_ready(mean_pool(x_nchw, channel_loc=1))
    ref1 = jnp.mean(x_nchw, axis=(2, 3))
    assert out1.shape == (2, 4)
    assert jnp.allclose(out1, ref1, atol=1e-5, rtol=1e-5)

    # 2) channel_loc = -1 path (NHWC, small C -> transpose fallback)
    x_nhwc = jax.random.normal(k2, (2, 16, 16, 4), dtype=jnp.float32)
    out2 = jax.block_until_ready(mean_pool(x_nhwc, channel_loc=-1))
    ref2 = jnp.mean(x_nhwc, axis=(1, 2))
    assert out2.shape == (2, 4)
    assert jnp.allclose(out2, ref2, atol=1e-5, rtol=1e-5)

    # 3) channel_loc = -1 path (NHWC, wide C -> native-layout kernel)
    x_nhwc_w = jax.random.normal(k3, (2, 8, 8, 128), dtype=jnp.float32)
    out3 = jax.block_until_ready(mean_pool(x_nhwc_w, channel_loc=-1))
    ref3 = jnp.mean(x_nhwc_w, axis=(1, 2))
    assert out3.shape == (2, 128)
    assert jnp.allclose(out3, ref3, atol=1e-5, rtol=1e-5)

    # 4) NCHW with rows (B*C) not a multiple of 8 -> exercises row padding
    x_rag = jax.random.normal(k4, (3, 2, 16, 16), dtype=jnp.float32)
    out4 = jax.block_until_ready(mean_pool(x_rag, channel_loc=1))
    ref4 = jnp.mean(x_rag, axis=(2, 3))
    assert out4.shape == (3, 2)
    assert jnp.allclose(out4, ref4, atol=1e-5, rtol=1e-5)

    print("KERNEL_OK")
</pallas_src>

<mosaic_0001>
module attributes {stable_mosaic.version = 11 : i64} {
  func.func @kernel(%arg0: i32, %arg1: i32, %arg2: memref<8x256xf32, #tpu.memory_space<vmem>>, %arg3: memref<8x1xf32, #tpu.memory_space<vmem>>, %arg4: memref<8x1xf32, #tpu.memory_space<vmem>>) attributes {dimension_semantics = [#tpu.dimension_semantics<parallel>, #tpu.dimension_semantics<arbitrary>], iteration_bounds = array<i64: 1, 1>, scalar_prefetch = 0 : i64, scratch_operands = 1 : i64, tpu.core_type = #tpu.core_type<tc>, window_params = [{transform_indices = @transform_0, window_bounds = array<i64: 8, 256>}, {transform_indices = @transform_1, window_bounds = array<i64: 8, 1>}]} {
    %c0_i32 = arith.constant 0 : i32
    %0 = arith.cmpi eq, %arg1, %c0_i32 : i32
    %1 = arith.extui %0 : i1 to i32
    %c0_i32_0 = arith.constant 0 : i32
    %2 = arith.cmpi ne, %1, %c0_i32_0 : i32
    scf.if %2 {
      %cst_8 = arith.constant 0.000000e+00 : f32
      %12 = vector.broadcast %cst_8 : f32 to vector<8x1xf32>
      %c0_9 = arith.constant 0 : index
      %c0_10 = arith.constant 0 : index
      %13 = vector.load %arg4[%c0_9, %c0_10] : memref<8x1xf32, #tpu.memory_space<vmem>>, vector<8x1xf32>
      tpu.vector_store %arg4[%c0_9, %c0_10], %12 {strides = array<i32>} : memref<8x1xf32, #tpu.memory_space<vmem>>, vector<8x1xf32>,
    } else {
    }
    %c0 = arith.constant 0 : index
    %c0_1 = arith.constant 0 : index
    %3 = vector.load %arg4[%c0, %c0_1] : memref<8x1xf32, #tpu.memory_space<vmem>>, vector<8x1xf32>
    %c0_2 = arith.constant 0 : index
    %c0_3 = arith.constant 0 : index
    %4 = vector.load %arg2[%c0_2, %c0_3] : memref<8x256xf32, #tpu.memory_space<vmem>>, vector<8x256xf32>
    %cst = arith.constant dense<0.000000e+00> : vector<8xf32>
    %5 = vector.multi_reduction <add>, %4, %cst [1] : vector<8x256xf32> to vector<8xf32>
    %6 = vector.shape_cast %5 : vector<8xf32> to vector<8x1xf32>
    %7 = arith.addf %3, %6 : vector<8x1xf32>
    %c0_4 = arith.constant 0 : index
    %c0_5 = arith.constant 0 : index
    %8 = vector.load %arg4[%c0_4, %c0_5] : memref<8x1xf32, #tpu.memory_space<vmem>>, vector<8x1xf32>
    tpu.vector_store %arg4[%c0_4, %c0_5], %7 {strides = array<i32>} : memref<8x1xf32, #tpu.memory_space<vmem>>, vector<8x1xf32>,
    %c0_i32_6 = arith.constant 0 : i32
    %9 = arith.cmpi eq, %arg1, %c0_i32_6 : i32
    %10 = arith.extui %9 : i1 to i32
    %c0_i32_7 = arith.constant 0 : i32
    %11 = arith.cmpi ne, %10, %c0_i32_7 : i32
    scf.if %11 {
      %c0_8 = arith.constant 0 : index
      %c0_9 = arith.constant 0 : index
      %12 = vector.load %arg4[%c0_8, %c0_9] : memref<8x1xf32, #tpu.memory_space<vmem>>, vector<8x1xf32>
      %cst_10 = arith.constant 3.906250e-03 : f32
      %13 = vector.broadcast %cst_10 : f32 to vector<8x1xf32>
      %14 = arith.mulf %12, %13 : vector<8x1xf32>
      %c0_11 = arith.constant 0 : index
      %c0_12 = arith.constant 0 : index
      %15 = vector.load %arg3[%c0_11, %c0_12] : memref<8x1xf32, #tpu.memory_space<vmem>>, vector<8x1xf32>
      tpu.vector_store %arg3[%c0_11, %c0_12], %14 {strides = array<i32>} : memref<8x1xf32, #tpu.memory_space<vmem>>, vector<8x1xf32>,
    } else {
    }
    return
  }
  func.func @transform_0(%arg0: i32, %arg1: i32) -> (i32, i32) {
    %c0_i32 = arith.constant 0 : i32
    return %arg0, %arg1 : i32, i32
  }
  func.func @transform_1(%arg0: i32, %arg1: i32) -> (i32, i32) {
    %c0_i32 = arith.constant 0 : i32
    %c0_i32_0 = arith.constant 0 : i32
    return %arg0, %c0_i32 : i32, i32
  }
}

</mosaic_0001>

<llo_original>
// kernel: tpu_custom_call.1
$region0: #{tpu_custom_call.1}
  #allocation0 [shape = 'u32[]', space=smem, size = 0x4, offset = 0x4, fixed_abs, tag = 'smem constant byte address 0x4 - core index']
  #allocation1 [shape = 'u32[72,128]{1,0:T(1,128)}', space=vmem, size = 0x9000, scoped, tag = 'internal scratch']
  #allocation2 [shape = 'f32[8,1]{1,0:T(8,128)}', space=vmem, size = 0x1000, scoped, tag = 'scratch operand']
  %s0 = inlined_call_operand.hbm [shape: f32[8,256], index: 0, kind: input, shape index: {}]
  %s1 = inlined_call_operand.vmem [shape: f32[8,1], index: 1, kind: output, shape index: {}]
  %s2 = sld [smem:[#allocation0]]
  $region26: #{tpu_custom_call.1} parent=0
    _
  %s4 = ssub.s32 1, %s2
  %s5 = scalar_select 0, %s4, %s2
  $region1: #{tpu_custom_call.1} parent=0
    #allocation3 [shape = 'u8[8192]{0}', space=vmem, size = 0x2000, scoped, tag = 'input window, operand 0, single buffered']
    #allocation4 [shape = 's32[1]{0}', space=sflag, size = 0x4, scoped, tag = 'scoped memory for tpu_custom_call.1']
    %6 = vsyncpa [#allocation4], 0
    // Predicated region
    $region2: #{tpu_custom_call.1} parent=1 // pred_check
      _
    $region3: #{tpu_custom_call.1} parent=1 // pred_check_branch
      %8 = sbr.rel (0) target = $region5
    $region4: #{tpu_custom_call.1} parent=1 // pred_region
      %10 = vsyncadd [#allocation4], 0
      %s12 = sshll.u32 %s0, 4
      %s13 = int_to_ptr.hbm [resolvable:$true] %s12
      %s14 = sshll.u32 [#allocation3], 4
      %s15 = int_to_ptr.vmem [resolvable:$true] %s14
      %17 = dma.hbm_to_vmem [thread:$0]  %s13, 256, %s15, [#allocation4]
    $region5: #{tpu_custom_call.1} parent=1 // pred_fallthru
      _
    // Predicated region
    $region6: #{tpu_custom_call.1} parent=1 // pred_check
      _
    $region7: #{tpu_custom_call.1} parent=1 // pred_check_branch
      %19 = sbr.rel (0) target = $region9
    $region8: #{tpu_custom_call.1} parent=1 // pred_region
      %21 = dma.done [#allocation4], 256
    $region9: #{tpu_custom_call.1} parent=1 // pred_fallthru
      _
    %p22 = scmp.eq.s32.totalorder 0, 0
    // Predicated region
    $region10: #{tpu_custom_call.1} parent=1 // pred_check
      %p23 = pneg %p22
    $region11: #{tpu_custom_call.1} parent=1 // pred_check_branch
      %25 = sbr.rel (%p23) target = $region13
    $region12: #{tpu_custom_call.1} parent=1 // pred_region
      %vm26 = vcmask 7168
      %27 = vst.msk [vmem:[#allocation2] sm:$0xff] %vm26, 0.0
    $region13: #{tpu_custom_call.1} parent=1 // pred_fallthru
      _
    %v28 = vld [vmem:[#allocation2] sm:$0xff]
    %v29 = vld [vmem:[#allocation3] sm:$0xff]
    %v30 = vld [vmem:[#allocation3 + $0x8] sm:$0xff]
    %v31 = vadd.f32 %v29, %v30
    %32 = vadd.xlane.f32.xlu0 %v31
    %v33 = vpop.xlane.xlu0 %32
    %v34 = vadd.f32 %v28, %v33
    %vm35 = vcmask 7168
    %36 = vst.msk [vmem:[#allocation2] sm:$0xff] %vm35, %v34
    // Predicated region
    $region14: #{tpu_custom_call.1} parent=1 // pred_check
      %p37 = pneg %p22
    $region15: #{tpu_custom_call.1} parent=1 // pred_check_branch
      %39 = sbr.rel (%p37) target = $region17
    $region16: #{tpu_custom_call.1} parent=1 // pred_region
      %v40 = vld [vmem:[#allocation2] sm:$0xff]
      %v41 = vmul.f32 %v40, 0.00390625
      %42 = vst.msk [vmem:[%s1] sm:$0xff] %vm35, %v41
    $region17: #{tpu_custom_call.1} parent=1 // pred_fallthru
      _
    // Predicated region
    $region18: #{tpu_custom_call.1} parent=1 // pred_check
      _
    $region19: #{tpu_custom_call.1} parent=1 // pred_check_branch
      %44 = sbr.rel (0) target = $region21
    $region20: #{tpu_custom_call.1} parent=1 // pred_region
      _
    $region21: #{tpu_custom_call.1} parent=1 // pred_fallthru
      _
    // Predicated region
    $region22: #{tpu_custom_call.1} parent=1 // pred_check
      _
    $region23: #{tpu_custom_call.1} parent=1 // pred_check_branch
      %46 = sbr.rel (0) target = $region25
    $region24: #{tpu_custom_call.1} parent=1 // pred_region
      _
    $region25: #{tpu_custom_call.1} parent=1 // pred_fallthru
      _
    %47 = vsyncpa [#allocation4], 1

</llo_original>
